<compile_context>
chip_gen: v5e
topology: v5e:2x2
jax: 0.10.0
libtpu: 0.0.40
codegen_flags: <defaults>
</compile_context>

<pallas_src>
import functools

import jax
import jax.numpy as jnp
from jax import lax
from jax.experimental import pallas as pl
from jax.experimental.pallas import tpu as pltpu


# ----------------------------- sizing helpers --------------------------------

def _rup(v, m):
    return (v + m - 1) // m * m


def _vmem_budget():
    """Per-generation scoped-VMEM budget (bytes) with headroom below capacity."""
    try:
        cap = int(pltpu.get_tpu_info().vmem_capacity_bytes)
    except Exception:                       # be conservative: v7x = 64 MiB per TC
        cap = 64 * 2 ** 20
    return max(16 * 2 ** 20, min(cap - 24 * 2 ** 20, (cap * 3) // 4))


def _attn_vmem_bytes(C, Ci, S_pad, tq):
    """Conservative working-set estimate for the attention kernel (padded tiles)."""
    Cs, Cis = _rup(C, 8), _rup(Ci, 8)
    Cil, tql, tqs = _rup(Ci, 128), _rup(tq, 128), _rup(tq, 8)
    b = 2 * tqs * Cil * 2                # theta tile (bf16), double-buffered
    b += 2 * 2 * Cis * S_pad * 2         # phi + g per-batch blocks (bf16), x2 buffers
    b += 2 * Cs * tql * 4                # residual x tile (f32), double-buffered
    b += 2 * Cs * tql * 4                # output tile (f32), double-buffered
    b += Cs * Cil * 2 + Cs * 128 * 4     # resident folded W_z weight + bias
    b += 2 * tqs * S_pad * 4             # live f32 score / exp value tiles
    return b


def _pick_tq(S_pad, est_fn, budget):
    """Largest query tile from {512, 256, 128} dividing S_pad that fits the budget.

    Note (v6e/v7x): the MXU is 256-wide, so TQ>=256 keeps full tiles; Ci=C//2 is
    the contraction dim of theta@phi — configs with Ci a multiple of 256 (128 on
    v5e) get full MXU width on the two dominant matmuls.
    """
    for t in (512, 256, 128):
        if S_pad % t == 0 and est_fn(t) <= budget:
            return t
    return 128


# ----------------------------- stage 1: projections --------------------------

def _proj_kernel(x_ref, wg_ref, bg_ref, wt_ref, bt_ref, wp_ref, bp_ref,
                 tht_ref, phi_ref, g_ref):
    """One (batch, key-tile) step: theta/phi/g 1x1-conv projections.

    x_ref:  (1, C, TK) f32     wg/wt/wp: (Ci, C) bf16 (VMEM resident)
    bg/bp:  (Ci, 1) f32        bt:       (1, Ci) f32 (token-major bias)
    outs:   theta (1, TK, Ci) bf16 token-major; phi/g (1, Ci, TK) bf16 channel-major
    """
    x_bf = x_ref[0].astype(jnp.bfloat16)                                     # (C, TK)
    ph = jnp.dot(wp_ref[...], x_bf,
                 preferred_element_type=jnp.float32) + bp_ref[...]          # (Ci, TK)
    gx = jnp.dot(wg_ref[...], x_bf,
                 preferred_element_type=jnp.float32) + bg_ref[...]          # (Ci, TK)
    # theta produced token-major directly by the matmul (no transpose / XLU work).
    th_t = lax.dot_general(x_bf, wt_ref[...],
                           dimension_numbers=(((0,), (1,)), ((), ())),
                           preferred_element_type=jnp.float32) + bt_ref[...]  # (TK, Ci)
    tht_ref[0] = th_t.astype(tht_ref.dtype)
    phi_ref[0] = ph.astype(phi_ref.dtype)
    g_ref[0] = gx.astype(g_ref.dtype)


# ------------------- stage 2: attention + folded W_z + residual --------------

def _attn_kernel(th_ref, ph_ref, g_ref, x_ref, wz_ref, bz_ref, o_ref,
                 *, s_valid, s_total):
    """One (batch, query-tile) step.

    th_ref: (1, TQ, Ci) bf16   ph_ref/g_ref: (1, Ci, S_pad) bf16
    x_ref:  (1, C, TQ) f32 residual tile     wz_ref: (C, Ci) bf16 (BN folded)
    bz_ref: (C, 1) f32                       o_ref:  (1, C, TQ) f32
    """
    # scores: every query row sees all keys; f32 accumulation on the MXU.
    f = jnp.dot(th_ref[0], ph_ref[0], preferred_element_type=jnp.float32)   # (TQ, S)
    if s_valid < s_total:                       # static: mask padded key columns
        key_idx = lax.broadcasted_iota(jnp.int32, f.shape, 1)
        f = jnp.where(key_idx < s_valid, f, -jnp.inf)

    # fused row softmax (no scratch round trips); approx reciprocal on the EUP.
    m = jnp.max(f, axis=-1, keepdims=True)
    e = jnp.exp(f - m)
    denom = jnp.sum(e, axis=-1, keepdims=True)
    p = (e * pl.reciprocal(denom, approx=True)).astype(jnp.bfloat16)        # (TQ, S)

    # y = p @ g^T (contract key axis), then folded W_z (eval-BN fused) + residual.
    y = lax.dot_general(p, g_ref[0],
                        dimension_numbers=(((1,), (1,)), ((), ())),
                        preferred_element_type=jnp.float32)                 # (TQ, Ci)
    w_y = lax.dot_general(wz_ref[...], y.astype(jnp.bfloat16),
                          dimension_numbers=(((1,), (1,)), ((), ())),
                          preferred_element_type=jnp.float32) + bz_ref[...]  # (C, TQ)
    o_ref[0] = (w_y + x_ref[0]).astype(o_ref.dtype)


# ----------------------------- wrapper ----------------------------------------

def nl_block_forward(x_nchw, params, *, tq=None):
    """x_nchw: (N, C, H, W) float32. Returns z with the same shape."""
    N, C, H, W = x_nchw.shape
    S = H * W
    S_pad = _rup(S, 128)
    Ci = params["wt"].shape[0]

    # NCHW -> (N, C, S): pure reshape; pad S to a lane-dense multiple of 128.
    x_cs = x_nchw.reshape(N, C, S)
    if S_pad != S:
        x_cs = jnp.pad(x_cs, ((0, 0), (0, 0), (0, S_pad - S)))

    budget = _vmem_budget()

    # One-time parameter prep: bf16 MXU operands, eval-BN folded into W_z.
    wg = params["wg"].astype(jnp.bfloat16)
    wt = params["wt"].astype(jnp.bfloat16)
    wp = params["wp"].astype(jnp.bfloat16)
    bg = params["bg"].astype(jnp.float32)                      # (Ci, 1)
    bp = params["bp"].astype(jnp.float32)                      # (Ci, 1)
    bt_row = params["bt"].astype(jnp.float32).reshape(1, Ci)   # (1, Ci) token-major
    wz_f = (params["bn_scale"] *
            params["wz"].astype(jnp.float32)).astype(jnp.bfloat16)          # (C, Ci)
    bz_f = (params["bn_scale"] * params["bz"] + params["bn_shift"]
            ).astype(jnp.float32)                                           # (C, 1)

    resident = pl.BlockSpec(memory_space=pltpu.MemorySpace.VMEM)

    # ---------------- stage 1: theta / phi / g projections -------------------
    tk = 512 if S_pad % 512 == 0 else (256 if S_pad % 256 == 0 else 128)
    theta_t, phi, g = pl.pallas_call(
        _proj_kernel,
        out_shape=(jax.ShapeDtypeStruct((N, S_pad, Ci), jnp.bfloat16),   # theta^T
                   jax.ShapeDtypeStruct((N, Ci, S_pad), jnp.bfloat16),   # phi
                   jax.ShapeDtypeStruct((N, Ci, S_pad), jnp.bfloat16)),  # g
        grid_spec=pltpu.PrefetchScalarGridSpec(
            num_scalar_prefetch=0,
            grid=(N, S_pad // tk),
            in_specs=[pl.BlockSpec((1, C, tk), lambda b, k: (b, 0, k)),
                      resident, resident, resident, resident, resident, resident],
            out_specs=(pl.BlockSpec((1, tk, Ci), lambda b, k: (b, k, 0)),
                       pl.BlockSpec((1, Ci, tk), lambda b, k: (b, 0, k)),
                       pl.BlockSpec((1, Ci, tk), lambda b, k: (b, 0, k)))),
        compiler_params=pltpu.CompilerParams(
            dimension_semantics=("parallel", "parallel"),
            vmem_limit_bytes=int(min(budget, 32 * 2 ** 20))),
    )(x_cs, wg, bg, wt, bt_row, wp, bp)

    # ---------------- stage 2: attention + W_z + residual --------------------
    est = functools.partial(_attn_vmem_bytes, C, Ci, S_pad)
    if tq is None:
        tq = _pick_tq(S_pad, est, budget)
    assert S_pad % tq == 0
    vmem_limit = int(min(budget, max(32 * 2 ** 20, est(tq) + (8 << 20))))

    out_cs = pl.pallas_call(
        functools.partial(_attn_kernel, s_valid=S, s_total=S_pad),
        out_shape=jax.ShapeDtypeStruct((N, C, S_pad), x_cs.dtype),
        grid_spec=pltpu.PrefetchScalarGridSpec(
            num_scalar_prefetch=0,
            grid=(N, S_pad // tq),
            in_specs=[pl.BlockSpec((1, tq, Ci), lambda b, q: (b, q, 0)),     # theta^T
                      pl.BlockSpec((1, Ci, S_pad), lambda b, q: (b, 0, 0)),  # phi
                      pl.BlockSpec((1, Ci, S_pad), lambda b, q: (b, 0, 0)),  # g
                      pl.BlockSpec((1, C, tq), lambda b, q: (b, 0, q)),      # residual
                      resident, resident],                                   # wz_f, bz_f
            out_specs=pl.BlockSpec((1, C, tq), lambda b, q: (b, 0, q))),
        compiler_params=pltpu.CompilerParams(
            # Projections are hoisted -> no cross-q state -> both axes parallel
            # (uses both TensorCores on v7x even for N=1 / odd N).
            dimension_semantics=("parallel", "parallel"),
            vmem_limit_bytes=vmem_limit),
    )(theta_t, phi, g, x_cs, wz_f, bz_f)

    # Drop spatial padding; (N, C, S) -> NCHW is a pure reshape.
    return out_cs[:, :, :S].reshape(N, C, H, W)


# ----------------------------- f32 reference ----------------------------------

def nl_block_reference(x_nchw, params):
    """Pure-JAX f32 reference reproducing the PyTorch forward (embedded, eval BN)."""
    N, C, H, W = x_nchw.shape
    S = H * W
    x_cs = x_nchw.reshape(N, C, S).astype(jnp.float32)

    wt = params["wt"].astype(jnp.float32)
    wp = params["wp"].astype(jnp.float32)
    wg = params["wg"].astype(jnp.float32)
    wz = params["wz"].astype(jnp.float32)

    theta = jnp.einsum("ic,ncs->nis", wt, x_cs, precision="highest") + params["bt"]
    phi = jnp.einsum("ic,ncs->nis", wp, x_cs, precision="highest") + params["bp"]
    g = jnp.einsum("ic,ncs->nis", wg, x_cs, precision="highest") + params["bg"]

    f = jnp.einsum("nis,nit->nst", theta, phi, precision="highest")   # (N, S, S)
    p = jax.nn.softmax(f, axis=-1)
    y = jnp.einsum("nst,nit->nis", p, g, precision="highest")          # (N, Ci, S)

    w_y = jnp.einsum("ci,nis->ncs", wz, y, precision="highest") + params["bz"]
    w_y = w_y * params["bn_scale"] + params["bn_shift"]
    return (w_y + x_cs).reshape(N, C, H, W)


def make_params(key, in_channels):
    """Deterministic init.  1x1-conv weights squeezed to 2-D, channel-major; matmul
    weights in bf16 (MXU operands), biases / BN affine in f32.  Values are random so
    the kernel exercises the full compute path (PyTorch zero-inits the BN gamma/beta
    which would make z == x trivially)."""
    C = in_channels
    Ci = max(C // 2, 1)
    ks = jax.random.split(key, 10)
    s = 0.1
    wg = (s * jax.random.normal(ks[0], (Ci, C), jnp.float32)).astype(jnp.bfloat16)
    bg = s * jax.random.normal(ks[1], (Ci, 1), jnp.float32)
    wt = (s * jax.random.normal(ks[2], (Ci, C), jnp.float32)).astype(jnp.bfloat16)
    bt = s * jax.random.normal(ks[3], (Ci, 1), jnp.float32)
    wp = (s * jax.random.normal(ks[4], (Ci, C), jnp.float32)).astype(jnp.bfloat16)
    bp = s * jax.random.normal(ks[5], (Ci, 1), jnp.float32)
    wz = (s * jax.random.normal(ks[6], (C, Ci), jnp.float32)).astype(jnp.bfloat16)
    bz = s * jax.random.normal(ks[7], (C, 1), jnp.float32)
    gamma = 1.0 + s * jax.random.normal(ks[8], (C, 1), jnp.float32)
    beta = s * jax.random.normal(ks[9], (C, 1), jnp.float32)
    # eval-mode BatchNorm with running_mean=0, running_var=1 (PyTorch init), eps=1e-5
    eps = 1e-5
    running_mean = jnp.zeros((C, 1), jnp.float32)
    running_var = jnp.ones((C, 1), jnp.float32)
    bn_scale = gamma / jnp.sqrt(running_var + eps)
    bn_shift = beta - running_mean * bn_scale
    return dict(wg=wg, bg=bg, wt=wt, bt=bt, wp=wp, bp=bp,
                wz=wz, bz=bz, bn_scale=bn_scale, bn_shift=bn_shift)


if __name__ == "__main__":
    key = jax.random.PRNGKey(0)
    k_x, k_p = jax.random.split(key)

    N, C, H, W = 2, 4, 16, 16          # dimension=2 -> S=256 (multiple of 128)
    x = jax.random.normal(k_x, (N, C, H, W), jnp.float32)
    params = make_params(k_p, C)

    z = jax.block_until_ready(nl_block_forward(x, params))
    z_ref = jax.block_until_ready(nl_block_reference(x, params))

    assert z.shape == x.shape and z.dtype == x.dtype
    err = float(jnp.max(jnp.abs(z - z_ref)))
    # bf16 MXU operands + approx reciprocal + BN-fold vs f32 reference -> relaxed tol.
    assert jnp.allclose(z, z_ref, atol=5e-3, rtol=5e-3), f"max abs diff = {err}"

    print("KERNEL_OK")
</pallas_src>

<mosaic_0001>
module attributes {stable_mosaic.version = 11 : i64} {
  func.func @_proj_kernel(%arg0: i32, %arg1: i32, %arg2: memref<1x4x256xf32, #tpu.memory_space<vmem>>, %arg3: memref<2x4xbf16, #tpu.memory_space<vmem>>, %arg4: memref<2x1xf32, #tpu.memory_space<vmem>>, %arg5: memref<2x4xbf16, #tpu.memory_space<vmem>>, %arg6: memref<1x2xf32, #tpu.memory_space<vmem>>, %arg7: memref<2x4xbf16, #tpu.memory_space<vmem>>, %arg8: memref<2x1xf32, #tpu.memory_space<vmem>>, %arg9: memref<1x256x2xbf16, #tpu.memory_space<vmem>>, %arg10: memref<1x2x256xbf16, #tpu.memory_space<vmem>>, %arg11: memref<1x2x256xbf16, #tpu.memory_space<vmem>>) attributes {dimension_semantics = [#tpu.dimension_semantics<parallel>, #tpu.dimension_semantics<parallel>], iteration_bounds = array<i64: 2, 1>, scalar_prefetch = 0 : i64, scratch_operands = 0 : i64, tpu.core_type = #tpu.core_type<tc>, window_params = [{transform_indices = @transform_0, window_bounds = array<i64: 1, 4, 256>}, {pipeline_mode = #tpu.pipeline_mode<synchronous>, transform_indices = @transform_1, window_bounds = array<i64: 2, 4>}, {pipeline_mode = #tpu.pipeline_mode<synchronous>, transform_indices = @transform_2, window_bounds = array<i64: 2, 1>}, {pipeline_mode = #tpu.pipeline_mode<synchronous>, transform_indices = @transform_3, window_bounds = array<i64: 2, 4>}, {pipeline_mode = #tpu.pipeline_mode<synchronous>, transform_indices = @transform_4, window_bounds = array<i64: 1, 2>}, {pipeline_mode = #tpu.pipeline_mode<synchronous>, transform_indices = @transform_5, window_bounds = array<i64: 2, 4>}, {pipeline_mode = #tpu.pipeline_mode<synchronous>, transform_indices = @transform_6, window_bounds = array<i64: 2, 1>}, {transform_indices = @transform_7, window_bounds = array<i64: 1, 256, 2>}, {transform_indices = @transform_8, window_bounds = array<i64: 1, 2, 256>}, {transform_indices = @transform_9, window_bounds = array<i64: 1, 2, 256>}]} {
    %c0 = arith.constant 0 : index
    %c0_0 = arith.constant 0 : index
    %c0_1 = arith.constant 0 : index
    %0 = vector.load %arg2[%c0, %c0_0, %c0_1] : memref<1x4x256xf32, #tpu.memory_space<vmem>>, vector<1x4x256xf32>
    %1 = vector.shape_cast %0 : vector<1x4x256xf32> to vector<4x256xf32>
    %2 = arith.truncf %1 : vector<4x256xf32> to vector<4x256xbf16>
    %c0_2 = arith.constant 0 : index
    %c0_3 = arith.constant 0 : index
    %3 = vector.load %arg7[%c0_2, %c0_3] : memref<2x4xbf16, #tpu.memory_space<vmem>>, vector<2x4xbf16>
    %cst = arith.constant dense<0.000000e+00> : vector<2x256xf32>
    %4 = tpu.matmul %3, %2, %cst {dimension_numbers = #tpu.dot_dimension_numbers<[1], [0], [0], [1], [0, 0, 1, 1], [], []>} : vector<2x4xbf16>, vector<4x256xbf16>, vector<2x256xf32> -> vector<2x256xf32>
    %c0_4 = arith.constant 0 : index
    %c0_5 = arith.constant 0 : index
    %5 = vector.load %arg8[%c0_4, %c0_5] : memref<2x1xf32, #tpu.memory_space<vmem>>, vector<2x1xf32>
    %6 = vector.broadcast %5 : vector<2x1xf32> to vector<2x256xf32>
    %7 = arith.addf %4, %6 : vector<2x256xf32>
    %c0_6 = arith.constant 0 : index
    %c0_7 = arith.constant 0 : index
    %8 = vector.load %arg3[%c0_6, %c0_7] : memref<2x4xbf16, #tpu.memory_space<vmem>>, vector<2x4xbf16>
    %cst_8 = arith.constant dense<0.000000e+00> : vector<2x256xf32>
    %9 = tpu.matmul %8, %2, %cst_8 {dimension_numbers = #tpu.dot_dimension_numbers<[1], [0], [0], [1], [0, 0, 1, 1], [], []>} : vector<2x4xbf16>, vector<4x256xbf16>, vector<2x256xf32> -> vector<2x256xf32>
    %c0_9 = arith.constant 0 : index
    %c0_10 = arith.constant 0 : index
    %10 = vector.load %arg4[%c0_9, %c0_10] : memref<2x1xf32, #tpu.memory_space<vmem>>, vector<2x1xf32>
    %11 = vector.broadcast %10 : vector<2x1xf32> to vector<2x256xf32>
    %12 = arith.addf %9, %11 : vector<2x256xf32>
    %c0_11 = arith.constant 0 : index
    %c0_12 = arith.constant 0 : index
    %13 = vector.load %arg5[%c0_11, %c0_12] : memref<2x4xbf16, #tpu.memory_space<vmem>>, vector<2x4xbf16>
    %cst_13 = arith.constant dense<0.000000e+00> : vector<256x2xf32>
    %14 = tpu.matmul %2, %13, %cst_13 {dimension_numbers = #tpu.dot_dimension_numbers<[0], [1], [1], [0], [0, 1, 1, 0], [], []>} : vector<4x256xbf16>, vector<2x4xbf16>, vector<256x2xf32> -> vector<256x2xf32>
    %c0_14 = arith.constant 0 : index
    %c0_15 = arith.constant 0 : index
    %15 = vector.load %arg6[%c0_14, %c0_15] : memref<1x2xf32, #tpu.memory_space<vmem>>, vector<1x2xf32>
    %16 = vector.broadcast %15 : vector<1x2xf32> to vector<256x2xf32>
    %17 = arith.addf %14, %16 : vector<256x2xf32>
    %18 = arith.truncf %17 : vector<256x2xf32> to vector<256x2xbf16>
    %c0_16 = arith.constant 0 : index
    %c0_17 = arith.constant 0 : index
    %c0_18 = arith.constant 0 : index
    %19 = vector.load %arg9[%c0_16, %c0_17, %c0_18] : memref<1x256x2xbf16, #tpu.memory_space<vmem>>, vector<1x256x2xbf16>
    %20 = vector.shape_cast %19 : vector<1x256x2xbf16> to vector<256x2xbf16>
    %21 = vector.shape_cast %18 : vector<256x2xbf16> to vector<1x256x2xbf16>
    tpu.vector_store %arg9[%c0_16, %c0_17, %c0_18], %21 {strides = array<i32>} : memref<1x256x2xbf16, #tpu.memory_space<vmem>>, vector<1x256x2xbf16>,
    %22 = arith.truncf %7 : vector<2x256xf32> to vector<2x256xbf16>
    %c0_19 = arith.constant 0 : index
    %c0_20 = arith.constant 0 : index
    %c0_21 = arith.constant 0 : index
    %23 = vector.load %arg10[%c0_19, %c0_20, %c0_21] : memref<1x2x256xbf16, #tpu.memory_space<vmem>>, vector<1x2x256xbf16>
    %24 = vector.shape_cast %23 : vector<1x2x256xbf16> to vector<2x256xbf16>
    %25 = vector.shape_cast %22 : vector<2x256xbf16> to vector<1x2x256xbf16>
    tpu.vector_store %arg10[%c0_19, %c0_20, %c0_21], %25 {strides = array<i32>} : memref<1x2x256xbf16, #tpu.memory_space<vmem>>, vector<1x2x256xbf16>,
    %26 = arith.truncf %12 : vector<2x256xf32> to vector<2x256xbf16>
    %c0_22 = arith.constant 0 : index
    %c0_23 = arith.constant 0 : index
    %c0_24 = arith.constant 0 : index
    %27 = vector.load %arg11[%c0_22, %c0_23, %c0_24] : memref<1x2x256xbf16, #tpu.memory_space<vmem>>, vector<1x2x256xbf16>
    %28 = vector.shape_cast %27 : vector<1x2x256xbf16> to vector<2x256xbf16>
    %29 = vector.shape_cast %26 : vector<2x256xbf16> to vector<1x2x256xbf16>
    tpu.vector_store %arg11[%c0_22, %c0_23, %c0_24], %29 {strides = array<i32>} : memref<1x2x256xbf16, #tpu.memory_space<vmem>>, vector<1x2x256xbf16>,
    return
  }
  func.func @transform_0(%arg0: i32, %arg1: i32) -> (i32, i32, i32) {
    %c0_i32 = arith.constant 0 : i32
    %c0_i32_0 = arith.constant 0 : i32
    return %arg0, %c0_i32, %arg1 : i32, i32, i32
  }
  func.func @transform_1(%arg0: i32, %arg1: i32) -> (i32, i32) {
    %c0_i32 = arith.constant 0 : i32
    %c0_i32_0 = arith.constant 0 : i32
    %c0_i32_1 = arith.constant 0 : i32
    return %c0_i32, %c0_i32_0 : i32, i32
  }
  func.func @transform_2(%arg0: i32, %arg1: i32) -> (i32, i32) {
    %c0_i32 = arith.constant 0 : i32
    %c0_i32_0 = arith.constant 0 : i32
    %c0_i32_1 = arith.constant 0 : i32
    return %c0_i32, %c0_i32_0 : i32, i32
  }
  func.func @transform_3(%arg0: i32, %arg1: i32) -> (i32, i32) {
    %c0_i32 = arith.constant 0 : i32
    %c0_i32_0 = arith.constant 0 : i32
    %c0_i32_1 = arith.constant 0 : i32
    return %c0_i32, %c0_i32_0 : i32, i32
  }
  func.func @transform_4(%arg0: i32, %arg1: i32) -> (i32, i32) {
    %c0_i32 = arith.constant 0 : i32
    %c0_i32_0 = arith.constant 0 : i32
    %c0_i32_1 = arith.constant 0 : i32
    return %c0_i32, %c0_i32_0 : i32, i32
  }
  func.func @transform_5(%arg0: i32, %arg1: i32) -> (i32, i32) {
    %c0_i32 = arith.constant 0 : i32
    %c0_i32_0 = arith.constant 0 : i32
    %c0_i32_1 = arith.constant 0 : i32
    return %c0_i32, %c0_i32_0 : i32, i32
  }
  func.func @transform_6(%arg0: i32, %arg1: i32) -> (i32, i32) {
    %c0_i32 = arith.constant 0 : i32
    %c0_i32_0 = arith.constant 0 : i32
    %c0_i32_1 = arith.constant 0 : i32
    return %c0_i32, %c0_i32_0 : i32, i32
  }
  func.func @transform_7(%arg0: i32, %arg1: i32) -> (i32, i32, i32) {
    %c0_i32 = arith.constant 0 : i32
    %c0_i32_0 = arith.constant 0 : i32
    return %arg0, %arg1, %c0_i32 : i32, i32, i32
  }
  func.func @transform_8(%arg0: i32, %arg1: i32) -> (i32, i32, i32) {
    %c0_i32 = arith.constant 0 : i32
    %c0_i32_0 = arith.constant 0 : i32
    return %arg0, %c0_i32, %arg1 : i32, i32, i32
  }
  func.func @transform_9(%arg0: i32, %arg1: i32) -> (i32, i32, i32) {
    %c0_i32 = arith.constant 0 : i32
    %c0_i32_0 = arith.constant 0 : i32
    return %arg0, %c0_i32, %arg1 : i32, i32, i32
  }
}

</mosaic_0001>

<llo_original>
// kernel: tpu_custom_call.1
$region0: #{tpu_custom_call.1}
  #allocation0 [shape = 'u32[]', space=smem, size = 0x4, offset = 0x4, fixed_abs, tag = 'smem constant byte address 0x4 - core index']
  #allocation1 [shape = 'u32[72,128]{1,0:T(1,128)}', space=vmem, size = 0x9000, scoped, tag = 'internal scratch']
  %s0 = inlined_call_operand.hbm [shape: f32[2,4,256], index: 0, kind: input, shape index: {}]
  %s1 = inlined_call_operand.vmem [shape: bf16[2,4], index: 1, kind: input, shape index: {}]
  %s2 = inlined_call_operand.vmem [shape: f32[2,1], index: 2, kind: input, shape index: {}]
  %s3 = inlined_call_operand.vmem [shape: bf16[2,4], index: 3, kind: input, shape index: {}]
  %s4 = inlined_call_operand.vmem [shape: f32[1,2], index: 4, kind: input, shape index: {}]
  %s5 = inlined_call_operand.vmem [shape: bf16[2,4], index: 5, kind: input, shape index: {}]
  %s6 = inlined_call_operand.vmem [shape: f32[2,1], index: 6, kind: input, shape index: {}]
  %s7 = inlined_call_operand.vmem [shape: bf16[2,256,2], index: 7, kind: output, shape index: {0}]
  %s8 = inlined_call_operand.hbm [shape: bf16[2,2,256], index: 8, kind: output, shape index: {1}]
  %s9 = inlined_call_operand.hbm [shape: bf16[2,2,256], index: 9, kind: output, shape index: {2}]
  %10 = xla_tuple %s7, %s8, %s9
  %s11 = sld [smem:[#allocation0]]
  $region81: #{tpu_custom_call.1} parent=0
    _
  %s13 = ssub.s32 1, %s11
  %s14 = scalar_select 0, %s13, %s11
  $region1: #{tpu_custom_call.1} parent=0
    #allocation2 [shape = 'u8[8192]{0}', space=vmem, size = 0x2000, scoped, tag = 'input window, operand 0']
    #allocation3 [shape = 's32[2]{0}', space=sflag, size = 0x8, scoped, tag = 'scoped memory for tpu_custom_call.1']
    #allocation4 [shape = 's32[2]{0}', space=sflag, size = 0x8, scoped, tag = 'scoped memory for tpu_custom_call.1']
    #allocation5 [shape = 'u8[2048]{0}', space=vmem, size = 0x800, scoped, tag = 'output window, operand 1']
    #allocation6 [shape = 'u8[2048]{0}', space=vmem, size = 0x800, scoped, tag = 'output window, operand 2']
    #allocation7 [shape = 's32[2]{0}', space=sflag, size = 0x8, scoped, tag = 'scoped memory for tpu_custom_call.1']
    %15 = vsyncpa [#allocation3], 0
    %s16 = scalar_lea.sflag [#allocation3], 1
    %17 = vsyncpa %s16, 0
    %18 = vsyncpa [#allocation4], 0
    %s19 = scalar_lea.sflag [#allocation4], 1
    %20 = vsyncpa %s19, 0
    %21 = vsyncpa [#allocation7], 0
    %s22 = scalar_lea.sflag [#allocation7], 1
    %23 = vsyncpa %s22, 0
    loop: start=0, step=1, limit=4
    $region2: #{tpu_custom_call.1} parent=1 // loop_pre_header
      _
    $region3: #{tpu_custom_call.1} parent=1 // loop_header
      %s25 = sphi 0, %s29
      %p26 = scmp.ge.s32.totalorder %s25, 4
      %s32 = sphi 0, %s44
      %s33 = sphi 0, %s40
      %s34 = sphi 0, %s32
      %s35 = sphi 0, %s33
      %s36 = sphi 0, %s34
      %s37 = sphi 0, %s35
      %s49 = sphi 0, %s51
      %s52 = sphi 0, %s49
      %s53 = sphi 0, %s52
      %s69 = sphi 0, %s53
      %s73 = sphi 0, %s73
      %s75 = sphi 0, %s73
      %s76 = sphi 0, %s75
      %s90 = sphi 0, %s76
      %s94 = sphi 0, %s94
      %s96 = sphi 0, %s94
      %s97 = sphi 0, %s96
      %s111 = sphi 0, %s97
      %s115 = sphi 0, %s115
      %s117 = sphi 0, %s115
      %s118 = sphi 0, %s117
      %s132 = sphi 0, %s118
      %s136 = sphi 0, %s136
      %s138 = sphi 0, %s136
      %s139 = sphi 0, %s138
      %s153 = sphi 0, %s139
      %s157 = sphi 0, %s157
      %s159 = sphi 0, %s157
      %s160 = sphi 0, %s159
      %s174 = sphi 0, %s160
      %s178 = sphi 0, %s178
      %s180 = sphi 0, %s178
      %s181 = sphi 0, %s180
      %s195 = sphi 0, %s181
      %s203 = sphi 0, %s205
      %s206 = sphi 0, %s203
      %s207 = sphi 0, %s206
      %s223 = sphi 0, %s207
      %s231 = sphi 0, %s233
      %s234 = sphi 0, %s231
      %s235 = sphi 0, %s234
      %s251 = sphi 0, %s235
      %s259 = sphi 0, %s261
      %s262 = sphi 0, %s259
      %s263 = sphi 0, %s262
      %s279 = sphi 0, %s263
    $region4: #{tpu_custom_call.1} parent=1 // loop_header_branch
      %28 = sbr.rel (%p26) target = $region8
    $region5: #{tpu_custom_call.1} parent=1 // loop_body
      %s30 = ssub.s32 %s25, 1
      %s31 = ssub.s32 %s25, 2
      %s38 = sadd.s32 1, %s33
      %p39 = scmp.ge.s32.totalorder %s38, 1
      %s40 = scalar_select %p39, 0, %s38
      %s41 = sadd.s32 1, %s32
      %s42 = scalar_select %p39, %s41, %s32
      %p43 = scmp.ge.s32.totalorder %s42, 2
      %s44 = scalar_select %p43, 0, %s42
      %s45 = ssub.s32 %s32, %s44
      %s46 = ssub.s32 %s33, %s40
      %s47 = sor.u32 %s45, %s46
      %p48 = scmp.eq.s32.totalorder %s47, 0
      %s50 = sadd.s32 %s49, 1
      %s51 = scalar_select %p48, %s49, %s50
      %p54 = pneg %p48
      %p55 = scmp.eq.s32.totalorder %s25, 1
      %p56 = por %p54, %p55
      %p57 = scmp.ne.s32.totalorder %s49, %s52
      %p58 = scmp.eq.s32.totalorder %s25, 0
      %p59 = por %p57, %p58
      %p60 = scmp.ne.s32.totalorder %s49, %s52
      %p61 = scmp.eq.s32.totalorder %s30, 1
      %p62 = por %p60, %p61
      %p63 = scmp.ne.s32.totalorder %s52, %s53
      %p64 = scmp.eq.s32.totalorder %s30, 0
      %p65 = por %p63, %p64
      %p66 = scmp.ne.s32.totalorder %s52, %s53
      %p67 = scmp.eq.s32.totalorder %s31, 1
      %p68 = por %p66, %p67
      %p70 = scmp.ne.s32.totalorder %s53, %s69
      %p71 = scmp.eq.s32.totalorder %s31, 0
      %p72 = por %p70, %p71
      %s74 = sadd.s32 %s73, 1
      %p77 = scmp.eq.s32.totalorder %s25, 1
      %p78 = scmp.ne.s32.totalorder %s73, %s75
      %p79 = scmp.eq.s32.totalorder %s25, 0
      %p80 = por %p78, %p79
      %p81 = scmp.ne.s32.totalorder %s73, %s75
      %p82 = scmp.eq.s32.totalorder %s30, 1
      %p83 = por %p81, %p82
      %p84 = scmp.ne.s32.totalorder %s75, %s76
      %p85 = scmp.eq.s32.totalorder %s30, 0
      %p86 = por %p84, %p85
      %p87 = scmp.ne.s32.totalorder %s75, %s76
      %p88 = scmp.eq.s32.totalorder %s31, 1
      %p89 = por %p87, %p88
      %p91 = scmp.ne.s32.totalorder %s76, %s90
      %p92 = scmp.eq.s32.totalorder %s31, 0
      %p93 = por %p91, %p92
      %s95 = sadd.s32 %s94, 1
      %p98 = scmp.eq.s32.totalorder %s25, 1
      %p99 = scmp.ne.s32.totalorder %s94, %s96
      %p100 = scmp.eq.s32.totalorder %s25, 0
      %p101 = por %p99, %p100
      %p102 = scmp.ne.s32.totalorder %s94, %s96
      %p103 = scmp.eq.s32.totalorder %s30, 1
      %p104 = por %p102, %p103
      %p105 = scmp.ne.s32.totalorder %s96, %s97
      %p106 = scmp.eq.s32.totalorder %s30, 0
      %p107 = por %p105, %p106
      %p108 = scmp.ne.s32.totalorder %s96, %s97
      %p109 = scmp.eq.s32.totalorder %s31, 1
      %p110 = por %p108, %p109
      %p112 = scmp.ne.s32.totalorder %s97, %s111
      %p113 = scmp.eq.s32.totalorder %s31, 0
      %p114 = por %p112, %p113
      %s116 = sadd.s32 %s115, 1
      %p119 = scmp.eq.s32.totalorder %s25, 1
      %p120 = scmp.ne.s32.totalorder %s115, %s117
      %p121 = scmp.eq.s32.totalorder %s25, 0
      %p122 = por %p120, %p121
      %p123 = scmp.ne.s32.totalorder %s115, %s117
      %p124 = scmp.eq.s32.totalorder %s30, 1
      %p125 = por %p123, %p124
      %p126 = scmp.ne.s32.totalorder %s117, %s118
      %p127 = scmp.eq.s32.totalorder %s30, 0
      %p128 = por %p126, %p127
      %p129 = scmp.ne.s32.totalorder %s117, %s118
      %p130 = scmp.eq.s32.totalorder %s31, 1
      %p131 = por %p129, %p130
      %p133 = scmp.ne.s32.totalorder %s118, %s132
      %p134 = scmp.eq.s32.totalorder %s31, 0
      %p135 = por %p133, %p134
      %s137 = sadd.s32 %s136, 1
      %p140 = scmp.eq.s32.totalorder %s25, 1
      %p141 = scmp.ne.s32.totalorder %s136, %s138
      %p142 = scmp.eq.s32.totalorder %s25, 0
      %p143 = por %p141, %p142
      %p144 = scmp.ne.s32.totalorder %s136, %s138
      %p145 = scmp.eq.s32.totalorder %s30, 1
      %p146 = por %p144, %p145
      %p147 = scmp.ne.s32.totalorder %s138, %s139
      %p148 = scmp.eq.s32.totalorder %s30, 0
      %p149 = por %p147, %p148
      %p150 = scmp.ne.s32.totalorder %s138, %s139
      %p151 = scmp.eq.s32.totalorder %s31, 1
      %p152 = por %p150, %p151
      %p154 = scmp.ne.s32.totalorder %s139, %s153
      %p155 = scmp.eq.s32.totalorder %s31, 0
      %p156 = por %p154, %p155
      %s158 = sadd.s32 %s157, 1
      %p161 = scmp.eq.s32.totalorder %s25, 1
      %p162 = scmp.ne.s32.totalorder %s157, %s159
      %p163 = scmp.eq.s32.totalorder %s25, 0
      %p164 = por %p162, %p163
      %p165 = scmp.ne.s32.totalorder %s157, %s159
      %p166 = scmp.eq.s32.totalorder %s30, 1
      %p167 = por %p165, %p166
      %p168 = scmp.ne.s32.totalorder %s159, %s160
      %p169 = scmp.eq.s32.totalorder %s30, 0
      %p170 = por %p168, %p169
      %p171 = scmp.ne.s32.totalorder %s159, %s160
      %p172 = scmp.eq.s32.totalorder %s31, 1
      %p173 = por %p171, %p172
      %p175 = scmp.ne.s32.totalorder %s160, %s174
      %p176 = scmp.eq.s32.totalorder %s31, 0
      %p177 = por %p175, %p176
      %s179 = sadd.s32 %s178, 1
      %p182 = scmp.eq.s32.totalorder %s25, 1
      %p183 = scmp.ne.s32.totalorder %s178, %s180
      %p184 = scmp.eq.s32.totalorder %s25, 0
      %p185 = por %p183, %p184
      %p186 = scmp.ne.s32.totalorder %s178, %s180
      %p187 = scmp.eq.s32.totalorder %s30, 1
      %p188 = por %p186, %p187
      %p189 = scmp.ne.s32.totalorder %s180, %s181
      %p190 = scmp.eq.s32.totalorder %s30, 0
      %p191 = por %p189, %p190
      %p192 = scmp.ne.s32.totalorder %s180, %s181
      %p193 = scmp.eq.s32.totalorder %s31, 1
      %p194 = por %p192, %p193
      %p196 = scmp.ne.s32.totalorder %s181, %s195
      %p197 = scmp.eq.s32.totalorder %s31, 0
      %p198 = por %p196, %p197
      %s199 = ssub.s32 %s32, %s44
      %s200 = ssub.s32 %s33, %s40
      %s201 = sor.u32 %s199, %s200
      %p202 = scmp.eq.s32.totalorder %s201, 0
      %s204 = sadd.s32 %s203, 1
      %s205 = scalar_select %p202, %s203, %s204
      %p208 = pneg %p202
      %p209 = scmp.eq.s32.totalorder %s25, 1
      %p210 = por %p208, %p209
      %p211 = scmp.ne.s32.totalorder %s203, %s206
      %p212 = scmp.eq.s32.totalorder %s25, 0
      %p213 = por %p211, %p212
      %p214 = scmp.ne.s32.totalorder %s203, %s206
      %p215 = scmp.eq.s32.totalorder %s30, 1
      %p216 = por %p214, %p215
      %p217 = scmp.ne.s32.totalorder %s206, %s207
      %p218 = scmp.eq.s32.totalorder %s30, 0
      %p219 = por %p217, %p218
      %p220 = scmp.ne.s32.totalorder %s206, %s207
      %p221 = scmp.eq.s32.totalorder %s31, 1
      %p222 = por %p220, %p221
      %p224 = scmp.ne.s32.totalorder %s207, %s223
      %p225 = scmp.eq.s32.totalorder %s31, 0
      %p226 = por %p224, %p225
      %s227 = ssub.s32 %s32, %s44
      %s228 = ssub.s32 %s33, %s40
      %s229 = sor.u32 %s227, %s228
      %p230 = scmp.eq.s32.totalorder %s229, 0
      %s232 = sadd.s32 %s231, 1
      %s233 = scalar_select %p230, %s231, %s232
      %p236 = pneg %p230
      %p237 = scmp.eq.s32.totalorder %s25, 1
      %p238 = por %p236, %p237
      %p239 = scmp.ne.s32.totalorder %s231, %s234
      %p240 = scmp.eq.s32.totalorder %s25, 0
      %p241 = por %p239, %p240
      %p242 = scmp.ne.s32.totalorder %s231, %s234
      %p243 = scmp.eq.s32.totalorder %s30, 1
      %p244 = por %p242, %p243
      %p245 = scmp.ne.s32.totalorder %s234, %s235
      %p246 = scmp.eq.s32.totalorder %s30, 0
      %p247 = por %p245, %p246
      %p248 = scmp.ne.s32.totalorder %s234, %s235
      %p249 = scmp.eq.s32.totalorder %s31, 1
      %p250 = por %p248, %p249
      %p252 = scmp.ne.s32.totalorder %s235, %s251
      %p253 = scmp.eq.s32.totalorder %s31, 0
      %p254 = por %p252, %p253
      %s255 = ssub.s32 %s32, %s44
      %s256 = ssub.s32 %s33, %s40
      %s257 = sor.u32 %s255, %s256
      %p258 = scmp.eq.s32.totalorder %s257, 0
      %s260 = sadd.s32 %s259, 1
      %s261 = scalar_select %p258, %s259, %s260
      %p264 = pneg %p258
      %p265 = scmp.eq.s32.totalorder %s25, 1
      %p266 = por %p264, %p265
      %p267 = scmp.ne.s32.totalorder %s259, %s262
      %p268 = scmp.eq.s32.totalorder %s25, 0
      %p269 = por %p267, %p268
      %p270 = scmp.ne.s32.totalorder %s259, %s262
      %p271 = scmp.eq.s32.totalorder %s30, 1
      %p272 = por %p270, %p271
      %p273 = scmp.ne.s32.totalorder %s262, %s263
      %p274 = scmp.eq.s32.totalorder %s30, 0
      %p275 = por %p273, %p274
      %p276 = scmp.ne.s32.totalorder %s262, %s263
      %p277 = scmp.eq.s32.totalorder %s31, 1
      %p278 = por %p276, %p277
      %p280 = scmp.ne.s32.totalorder %s263, %s279
      %p281 = scmp.eq.s32.totalorder %s31, 0
      %p282 = por %p280, %p281
      %p283 = scmp.le.s32.totalorder 1, %s25
      %p284 = scmp.lt.s32.totalorder %s25, 3
      %p285 = pnand %p283, %p284
      %p286 = pneg %p285
      // Predicated region
      $region9: #{tpu_custom_call.1} parent=5 // pred_check
        _
      $region10: #{tpu_custom_call.1} parent=5 // pred_check_branch
        %288 = sbr.rel (%p285) target = $region12
      $region11: #{tpu_custom_call.1} parent=5 // pred_region
        %s289 = ssub.s32 %s25, 1
        // Predicated region
        $region13: #{tpu_custom_call.1} parent=11 // pred_check
          %p290 = pneg %p86
        $region14: #{tpu_custom_call.1} parent=11 // pred_check_branch
          %292 = sbr.rel (%p290) target = $region16
        $region15: #{tpu_custom_call.1} parent=11 // pred_region
          _
        $region16: #{tpu_custom_call.1} parent=11 // pred_fallthru
          _
        // Predicated region
        $region17: #{tpu_custom_call.1} parent=11 // pred_check
          %p293 = pneg %p107
        $region18: #{tpu_custom_call.1} parent=11 // pred_check_branch
          %295 = sbr.rel (%p293) target = $region20
        $region19: #{tpu_custom_call.1} parent=11 // pred_region
          _
        $region20: #{tpu_custom_call.1} parent=11 // pred_fallthru
          _
        // Predicated region
        $region21: #{tpu_custom_call.1} parent=11 // pred_check
          %p296 = pneg %p128
        $region22: #{tpu_custom_call.1} parent=11 // pred_check_branch
          %298 = sbr.rel (%p296) target = $region24
        $region23: #{tpu_custom_call.1} parent=11 // pred_region
          _
        $region24: #{tpu_custom_call.1} parent=11 // pred_fallthru
          _
        // Predicated region
        $region25: #{tpu_custom_call.1} parent=11 // pred_check
          %p299 = pneg %p149
        $region26: #{tpu_custom_call.1} parent=11 // pred_check_branch
          %301 = sbr.rel (%p299) target = $region28
        $region27: #{tpu_custom_call.1} parent=11 // pred_region
          _
        $region28: #{tpu_custom_call.1} parent=11 // pred_fallthru
          _
        // Predicated region
        $region29: #{tpu_custom_call.1} parent=11 // pred_check
          %p302 = pneg %p170
        $region30: #{tpu_custom_call.1} parent=11 // pred_check_branch
          %304 = sbr.rel (%p302) target = $region32
        $region31: #{tpu_custom_call.1} parent=11 // pred_region
          _
        $region32: #{tpu_custom_call.1} parent=11 // pred_fallthru
          _
        // Predicated region
        $region33: #{tpu_custom_call.1} parent=11 // pred_check
          %p305 = pneg %p191
        $region34: #{tpu_custom_call.1} parent=11 // pred_check_branch
          %307 = sbr.rel (%p305) target = $region36
        $region35: #{tpu_custom_call.1} parent=11 // pred_region
          _
        $region36: #{tpu_custom_call.1} parent=11 // pred_fallthru
          _
      $region12: #{tpu_custom_call.1} parent=5 // pred_fallthru
        _
      %p308 = scmp.lt.s32.totalorder %s25, 2
      // Predicated region
      $region37: #{tpu_custom_call.1} parent=5 // pred_check
        %p309 = pneg %p308
      $region38: #{tpu_custom_call.1} parent=5 // pred_check_branch
        %311 = sbr.rel (%p309) target = $region40
      $region39: #{tpu_custom_call.1} parent=5 // pred_region
        // Predicated region
        $region41: #{tpu_custom_call.1} parent=39 // pred_check
          %p312 = pneg %p59
        $region42: #{tpu_custom_call.1} parent=39 // pred_check_branch
          %314 = sbr.rel (%p312) target = $region44
        $region43: #{tpu_custom_call.1} parent=39 // pred_region
          %s315 = sand.u32 %s49, 1
          %s316 = scalar_lea.sflag [#allocation3], %s315
          %s317 = sand.u32 %s49, 1
          %s318 = smul.addr %s317, 8
          %s319 = scalar_lea.vmem [#allocation2], %s318
          %s320 = smul.u32 2, %s33
          %322 = vsyncadd %s316, 0
          %s323 = smul.addr %s32, 2
          %s324 = sadd.s32 %s320, %s323
          %s325 = smul.addr %s324, 4
          %s326 = scalar_lea.hbm %s0, %s325
          %s328 = sshll.u32 %s326, 4
          %s329 = int_to_ptr.hbm [resolvable:$true] %s328
          %s330 = sshll.u32 %s319, 4
          %s331 = int_to_ptr.vmem [resolvable:$true] %s330
          %333 = dma.hbm_to_vmem [thread:$0]  %s329, 128, %s331, %s316
        $region44: #{tpu_custom_call.1} parent=39 // pred_fallthru
          _
      $region40: #{tpu_custom_call.1} parent=5 // pred_fallthru
        _
      %p334 = scmp.le.s32.totalorder 1, %s25
      %p335 = scmp.lt.s32.totalorder %s25, 3
      %p336 = pnand %p334, %p335
      %p337 = pneg %p336
      // Predicated region
      $region45: #{tpu_custom_call.1} parent=5 // pred_check
        _
      $region46: #{tpu_custom_call.1} parent=5 // pred_check_branch
        %339 = sbr.rel (%p336) target = $region48
      $region47: #{tpu_custom_call.1} parent=5 // pred_region
        %s340 = ssub.s32 %s25, 1
        %s341 = sand.u32 %s52, 1
        %s342 = scalar_lea.sflag [#allocation3], %s341
        %s343 = sand.u32 %s52, 1
        %s344 = smul.addr %s343, 8
        %s345 = scalar_lea.vmem [#allocation2], %s344
        // Predicated region
        $region49: #{tpu_custom_call.1} parent=47 // pred_check
          %p346 = pneg %p65
        $region50: #{tpu_custom_call.1} parent=47 // pred_check_branch
          %348 = sbr.rel (%p346) target = $region52
        $region51: #{tpu_custom_call.1} parent=47 // pred_region
          %350 = dma.done %s342, 128
        $region52: #{tpu_custom_call.1} parent=47 // pred_fallthru
          _
        %s351 = sand.u32 %s52, 1
        %s352 = scalar_lea.sflag [#allocation3], %s351
        %s353 = sand.u32 %s52, 1
        %s354 = smul.addr %s353, 8
        %s355 = scalar_lea.vmem [#allocation2], %s354
        %p356 = pneg %p65
        %p357 = pneg %p62
        %p358 = pneg %p86
        %p359 = pneg %p83
        %p360 = pneg %p107
        %p361 = pneg %p104
        %p362 = pneg %p128
        %p363 = pneg %p125
        %p364 = pneg %p149
        %p365 = pneg %p146
        %p366 = pneg %p170
        %p367 = pneg %p167
        %p368 = pneg %p191
        %p369 = pneg %p188
        %p370 = pneg %p219
        %p371 = pneg %p216
        %s372 = smul.u32 32, %s35
        %p373 = scmp.lt.s32.totalorder %s34, 1
        %s374 = scalar_select %p373, %s34, 1
        %p375 = scmp.lt.s32.totalorder %s372, 31
        %s376 = scalar_select %p375, %s372, 31
        %s377 = smul.addr %s374, 32
        %s378 = sadd.s32 %s376, %s377
        %s379 = smul.addr %s378, 4
        %s380 = scalar_lea.vmem %s7, %s379
        %p381 = pneg %p247
        %p382 = pneg %p244
        %s383 = sand.u32 %s234, 1
        %s384 = scalar_lea.sflag [#allocation4], %s383
        %s385 = sand.u32 %s234, 1
        %s386 = smul.addr %s385, 2
        %s387 = scalar_lea.vmem [#allocation5], %s386
        %p388 = pneg %p275
        %p389 = pneg %p272
        %s390 = sand.u32 %s262, 1
        %s391 = scalar_lea.sflag [#allocation7], %s390
        %s392 = sand.u32 %s262, 1
        %s393 = smul.addr %s392, 2
        %s394 = scalar_lea.vmem [#allocation6], %s393
        %s395 = smul.u32 2, %s35
        %s396 = smul.u32 32, %s35
        %p397 = scmp.lt.s32.totalorder %s34, 1
        %s398 = scalar_select %p397, %s34, 1
        %p399 = scmp.lt.s32.totalorder %s396, 31
        %s400 = scalar_select %p399, %s396, 31
        %s401 = smul.addr %s398, 32
        %s402 = sadd.s32 %s400, %s401
        %s403 = smul.addr %s402, 4
        %s404 = scalar_lea.vmem %s7, %s403
        %s405 = smul.u32 32, %s35
        %s406 = smul.u32 2, %s35
        %s407 = smul.u32 2, %s35
        %v409 = vld [vmem:[%s345] sm:$0xff]
        %411 = vst [vmem:[#allocation1] ss:$2 sm:$0xff] %v409
        %v412 = vld.sshfl [vmem:[#allocation1] sm:$0xff pattern:$0x75316420]
        %v413 = vld.sshfl [vmem:[#allocation1 + $0x8] sm:$0xff pattern:$0x75316420]
        %v416 = vpack.c.bf16 %v412, %v412
        %v417 = vpack.c.bf16 %v413, %v413
        %v418 = vld [vmem:[%s5] sm:$0x1]
        %v419 = vld [vmem:[%s6] sm:$0x3]
        %421 = vset.pattern.permute.xlu0 0
        %422 = vperm.xlu0 %421, %v419
        %v423 = vpop.permute.xlu0 %422
        %vm425 = vcmask 31744
        %v427 = vsel %vm425, %v418, 0
        %vm429 = vcmask 1041408
        %v431 = vsel %vm429, %v416, 0
        %v434 = vsel %vm429, %v417, 0
        %436 = vmatpush.bf16.msra.mxu0 0
        %437 = vmatpush.bf16.msra.mxu0 0
        %438 = vmatpush.bf16.msra.mxu0 0
        %439 = vmatpush.bf16.msra.mxu0 0
        %440 = vmatpush.bf16.msra.mxu0 0
        %441 = vmatpush.bf16.msra.mxu0 0
        %442 = vmatpush.bf16.msra.mxu0 0
        %443 = vmatpush.bf16.msra.mxu0 %v431
        %444 = vmatmul.bf16.gmra.mxu0 %v427
        %v445 = vpop.f32.mrf.mxu0
        %v446 = vadd.f32 %v423, %v445
        %v447 = vpop.f32.mrf.mxu0
        %448 = vdwg.mxu0
        %449 = vmatpush.bf16.msra.mxu0 0
        %450 = vmatpush.bf16.msra.mxu0 0
        %451 = vmatpush.bf16.msra.mxu0 0
        %452 = vmatpush.bf16.msra.mxu0 0
        %453 = vmatpush.bf16.msra.mxu0 0
        %454 = vmatpush.bf16.msra.mxu0 0
        %455 = vmatpush.bf16.msra.mxu0 0
        %456 = vmatpush.bf16.msra.mxu0 %v434
        %457 = vmatmul.bf16.gmra.mxu0 %v427
        %v458 = vpop.f32.mrf.mxu0
        %v459 = vadd.f32 %v423, %v458
        %v460 = vpop.f32.mrf.mxu0
        %461 = vdwg.mxu0
        %v462 = vld [vmem:[%s1] sm:$0x1]
        %v463 = vld [vmem:[%s2] sm:$0x3]
        %465 = vset.pattern.permute.xlu0 0
        %466 = vperm.xlu0 %465, %v463
        %v467 = vpop.permute.xlu0 %466
        %v470 = vsel %vm425, %v462, 0
        %472 = vmatpush.bf16.msra.mxu0 0
        %473 = vmatpush.bf16.msra.mxu0 0
        %474 = vmatpush.bf16.msra.mxu0 0
        %475 = vmatpush.bf16.msra.mxu0 0
        %476 = vmatpush.bf16.msra.mxu0 0
        %477 = vmatpush.bf16.msra.mxu0 0
        %478 = vmatpush.bf16.msra.mxu0 0
        %479 = vmatpush.bf16.msra.mxu0 %v431
        %480 = vmatmul.bf16.gmra.mxu0 %v470
        %v481 = vpop.f32.mrf.mxu0
        %v482 = vadd.f32 %v467, %v481
        %v483 = vpop.f32.mrf.mxu0
        %484 = vdwg.mxu0
        %485 = vmatpush.bf16.msra.mxu0 0
        %486 = vmatpush.bf16.msra.mxu0 0
        %487 = vmatpush.bf16.msra.mxu0 0
        %488 = vmatpush.bf16.msra.mxu0 0
        %489 = vmatpush.bf16.msra.mxu0 0
        %490 = vmatpush.bf16.msra.mxu0 0
        %491 = vmatpush.bf16.msra.mxu0 0
        %492 = vmatpush.bf16.msra.mxu0 %v434
        %493 = vmatmul.bf16.gmra.mxu0 %v470
        %v494 = vpop.f32.mrf.mxu0
        %v495 = vadd.f32 %v467, %v494
        %v496 = vpop.f32.mrf.mxu0
        %497 = vdwg.mxu0
        %v498 = vld [vmem:[%s3] sm:$0x1]
        %v499 = vld [vmem:[%s4] sm:$0x1]
        %v501 = vperm.slane %v499, 0
        %503 = vxpose.binary.xlu0.c.b16.start [1/16] %v417, %v416, 128
        %504 = vxpose.binary.xlu0.c.b16.cont [2/16] 0, 0, 128
        %505 = vxpose.binary.xlu0.c.b16.cont [3/16] 0, 0, 128
        %506 = vxpose.binary.xlu0.c.b16.cont [4/16] 0, 0, 128
        %507 = vxpose.binary.xlu0.c.b16.cont [5/16] 0, 0, 128
        %508 = vxpose.binary.xlu0.c.b16.cont [6/16] 0, 0, 128
        %509 = vxpose.binary.xlu0.c.b16.cont [7/16] 0, 0, 128
        %510 = vxpose.binary.xlu0.c.b16.end [8/16] 0, 0, 128
        %v511 = vpop.trf.xlu0
        %v512 = vpop.trf.xlu0
        %v513 = vpop.trf.xlu0
        %v514 = vpop.trf.xlu0
        %v515 = vpop.trf.xlu0
        %v516 = vpop.trf.xlu0
        %v517 = vpop.trf.xlu0
        %v518 = vpop.trf.xlu0
        %v519 = vpop.trf.xlu0
        %v520 = vpop.trf.xlu0
        %v521 = vpop.trf.xlu0
        %v522 = vpop.trf.xlu0
        %v523 = vpop.trf.xlu0
        %v524 = vpop.trf.xlu0
        %v525 = vpop.trf.xlu0
        %v526 = vpop.trf.xlu0
        %v528 = vsel %vm425, %v511, 0
        %v531 = vsel %vm425, %v513, 0
        %v534 = vsel %vm425, %v515, 0
        %v537 = vsel %vm425, %v517, 0
        %v540 = vsel %vm425, %v519, 0
        %v543 = vsel %vm425, %v521, 0
        %v546 = vsel %vm425, %v523, 0
        %v549 = vsel %vm425, %v525, 0
        %v552 = vsel %vm425, %v512, 0
        %v555 = vsel %vm425, %v514, 0
        %v558 = vsel %vm425, %v516, 0
        %v561 = vsel %vm425, %v518, 0
        %v564 = vsel %vm425, %v520, 0
        %v567 = vsel %vm425, %v522, 0
        %v570 = vsel %vm425, %v524, 0
        %v573 = vsel %vm425, %v526, 0
        %v576 = vsel %vm425, %v498, 0
        %578 = vmatpush.bf16.xpose.msra.mxu0 0
        %579 = vmatpush.bf16.xpose.msra.mxu0 0
        %580 = vmatpush.bf16.xpose.msra.mxu0 0
        %581 = vmatpush.bf16.xpose.msra.mxu0 0
        %582 = vmatpush.bf16.xpose.msra.mxu0 0
        %583 = vmatpush.bf16.xpose.msra.mxu0 0
        %584 = vmatpush.bf16.xpose.msra.mxu0 0
        %585 = vmatpush.bf16.xpose.msra.mxu0 %v576
        %586 = vmatmul.bf16.gmra.mxu0 %v528
        %v587 = vpop.f32.mrf.mxu0
        %v588 = vadd.f32 %v501, %v587
        %v589 = vpop.f32.mrf.mxu0
        %v590 = vadd.f32 %v501, %v589
        %591 = vmatmul.bf16.gmra.mxu0 %v531
        %v592 = vpop.f32.mrf.mxu0
        %v593 = vadd.f32 %v501, %v592
        %v594 = vpop.f32.mrf.mxu0
        %v595 = vadd.f32 %v501, %v594
        %596 = vmatmul.bf16.gmra.mxu0 %v534
        %v597 = vpop.f32.mrf.mxu0
        %v598 = vadd.f32 %v501, %v597
        %v599 = vpop.f32.mrf.mxu0
        %v600 = vadd.f32 %v501, %v599
        %601 = vmatmul.bf16.gmra.mxu0 %v537
        %v602 = vpop.f32.mrf.mxu0
        %v603 = vadd.f32 %v501, %v602
        %v604 = vpop.f32.mrf.mxu0
        %v605 = vadd.f32 %v501, %v604
        %606 = vmatmul.bf16.gmra.mxu0 %v540
        %v607 = vpop.f32.mrf.mxu0
        %v608 = vadd.f32 %v501, %v607
        %v609 = vpop.f32.mrf.mxu0
        %v610 = vadd.f32 %v501, %v609
        %611 = vmatmul.bf16.gmra.mxu0 %v543
        %v612 = vpop.f32.mrf.mxu0
        %v613 = vadd.f32 %v501, %v612
        %v614 = vpop.f32.mrf.mxu0
        %v615 = vadd.f32 %v501, %v614
        %616 = vmatmul.bf16.gmra.mxu0 %v546
        %v617 = vpop.f32.mrf.mxu0
        %v618 = vadd.f32 %v501, %v617
        %v619 = vpop.f32.mrf.mxu0
        %v620 = vadd.f32 %v501, %v619
        %621 = vmatmul.bf16.gmra.mxu0 %v549
        %v622 = vpop.f32.mrf.mxu0
        %v623 = vadd.f32 %v501, %v622
        %v624 = vpop.f32.mrf.mxu0
        %v625 = vadd.f32 %v501, %v624
        %626 = vmatmul.bf16.gmra.mxu0 %v552
        %v627 = vpop.f32.mrf.mxu0
        %v628 = vadd.f32 %v501, %v627
        %v629 = vpop.f32.mrf.mxu0
        %v630 = vadd.f32 %v501, %v629
        %631 = vmatmul.bf16.gmra.mxu0 %v555
        %v632 = vpop.f32.mrf.mxu0
        %v633 = vadd.f32 %v501, %v632
        %v634 = vpop.f32.mrf.mxu0
        %v635 = vadd.f32 %v501, %v634
        %636 = vmatmul.bf16.gmra.mxu0 %v558
        %v637 = vpop.f32.mrf.mxu0
        %v638 = vadd.f32 %v501, %v637
        %v639 = vpop.f32.mrf.mxu0
        %v640 = vadd.f32 %v501, %v639
        %641 = vmatmul.bf16.gmra.mxu0 %v561
        %v642 = vpop.f32.mrf.mxu0
        %v643 = vadd.f32 %v501, %v642
        %v644 = vpop.f32.mrf.mxu0
        %v645 = vadd.f32 %v501, %v644
        %646 = vmatmul.bf16.gmra.mxu0 %v564
        %v647 = vpop.f32.mrf.mxu0
        %v648 = vadd.f32 %v501, %v647
        %v649 = vpop.f32.mrf.mxu0
        %v650 = vadd.f32 %v501, %v649
        %651 = vmatmul.bf16.gmra.mxu0 %v567
        %v652 = vpop.f32.mrf.mxu0
        %v653 = vadd.f32 %v501, %v652
        %v654 = vpop.f32.mrf.mxu0
        %v655 = vadd.f32 %v501, %v654
        %656 = vmatmul.bf16.gmra.mxu0 %v570
        %v657 = vpop.f32.mrf.mxu0
        %v658 = vadd.f32 %v501, %v657
        %v659 = vpop.f32.mrf.mxu0
        %v660 = vadd.f32 %v501, %v659
        %661 = vmatmul.bf16.gmra.mxu0 %v573
        %v662 = vpop.f32.mrf.mxu0
        %v663 = vadd.f32 %v501, %v662
        %v664 = vpop.f32.mrf.mxu0
        %v665 = vadd.f32 %v501, %v664
        %666 = vdwg.mxu0
        %v667 = vpack.c.bf16 %v588, %v588
        %v668 = vpack.c.bf16 %v590, %v590
        %v669 = vpack.c.bf16 %v593, %v593
        %v670 = vpack.c.bf16 %v595, %v595
        %v671 = vpack.c.bf16 %v598, %v598
        %v672 = vpack.c.bf16 %v600, %v600
        %v673 = vpack.c.bf16 %v603, %v603
        %v674 = vpack.c.bf16 %v605, %v605
        %v675 = vpack.c.bf16 %v608, %v608
        %v676 = vpack.c.bf16 %v610, %v610
        %v677 = vpack.c.bf16 %v613, %v613
        %v678 = vpack.c.bf16 %v615, %v615
        %v679 = vpack.c.bf16 %v618, %v618
        %v680 = vpack.c.bf16 %v620, %v620
        %v681 = vpack.c.bf16 %v623, %v623
        %v682 = vpack.c.bf16 %v625, %v625
        %v683 = vpack.c.bf16 %v628, %v628
        %v684 = vpack.c.bf16 %v630, %v630
        %v685 = vpack.c.bf16 %v633, %v633
        %v686 = vpack.c.bf16 %v635, %v635
        %v687 = vpack.c.bf16 %v638, %v638
        %v688 = vpack.c.bf16 %v640, %v640
        %v689 = vpack.c.bf16 %v643, %v643
        %v690 = vpack.c.bf16 %v645, %v645
        %v691 = vpack.c.bf16 %v648, %v648
        %v692 = vpack.c.bf16 %v650, %v650
        %v693 = vpack.c.bf16 %v653, %v653
        %v694 = vpack.c.bf16 %v655, %v655
        %v695 = vpack.c.bf16 %v658, %v658
        %v696 = vpack.c.bf16 %v660, %v660
        %v697 = vpack.c.bf16 %v663, %v663
        %v698 = vpack.c.bf16 %v665, %v665
        %vm699 = vcmask 11264
        %700 = vst.msk [vmem:[%s404] sm:$0xf] %vm699, %v667
        %701 = vst.msk [vmem:[%s404 + $0x4] sm:$0xf] %vm699, %v668
        %702 = vst.msk [vmem:[%s404 + $0x8] sm:$0xf] %vm699, %v669
        %703 = vst.msk [vmem:[%s404 + $0xc] sm:$0xf] %vm699, %v670
        %704 = vst.msk [vmem:[%s404 + $0x10] sm:$0xf] %vm699, %v671
        %705 = vst.msk [vmem:[%s404 + $0x14] sm:$0xf] %vm699, %v672
        %706 = vst.msk [vmem:[%s404 + $0x18] sm:$0xf] %vm699, %v673
        %707 = vst.msk [vmem:[%s404 + $0x1c] sm:$0xf] %vm699, %v674
        %708 = vst.msk [vmem:[%s404 + $0x20] sm:$0xf] %vm699, %v675
        %709 = vst.msk [vmem:[%s404 + $0x24] sm:$0xf] %vm699, %v676
        %710 = vst.msk [vmem:[%s404 + $0x28] sm:$0xf] %vm699, %v677
        %711 = vst.msk [vmem:[%s404 + $0x2c] sm:$0xf] %vm699, %v678
        %712 = vst.msk [vmem:[%s404 + $0x30] sm:$0xf] %vm699, %v679
        %713 = vst.msk [vmem:[%s404 + $0x34] sm:$0xf] %vm699, %v680
        %714 = vst.msk [vmem:[%s404 + $0x38] sm:$0xf] %vm699, %v681
        %715 = vst.msk [vmem:[%s404 + $0x3c] sm:$0xf] %vm699, %v682
        %716 = vst.msk [vmem:[%s404 + $0x40] sm:$0xf] %vm699, %v683
        %717 = vst.msk [vmem:[%s404 + $0x44] sm:$0xf] %vm699, %v684
        %718 = vst.msk [vmem:[%s404 + $0x48] sm:$0xf] %vm699, %v685
        %719 = vst.msk [vmem:[%s404 + $0x4c] sm:$0xf] %vm699, %v686
        %720 = vst.msk [vmem:[%s404 + $0x50] sm:$0xf] %vm699, %v687
        %721 = vst.msk [vmem:[%s404 + $0x54] sm:$0xf] %vm699, %v688
        %722 = vst.msk [vmem:[%s404 + $0x58] sm:$0xf] %vm699, %v689
        %723 = vst.msk [vmem:[%s404 + $0x5c] sm:$0xf] %vm699, %v690
        %724 = vst.msk [vmem:[%s404 + $0x60] sm:$0xf] %vm699, %v691
        %725 = vst.msk [vmem:[%s404 + $0x64] sm:$0xf] %vm699, %v692
        %726 = vst.msk [vmem:[%s404 + $0x68] sm:$0xf] %vm699, %v693
        %727 = vst.msk [vmem:[%s404 + $0x6c] sm:$0xf] %vm699, %v694
        %728 = vst.msk [vmem:[%s404 + $0x70] sm:$0xf] %vm699, %v695
        %729 = vst.msk [vmem:[%s404 + $0x74] sm:$0xf] %vm699, %v696
        %730 = vst.msk [vmem:[%s404 + $0x78] sm:$0xf] %vm699, %v697
        %731 = vst.msk [vmem:[%s404 + $0x7c] sm:$0xf] %vm699, %v698
        %v732 = vpack.c.bf16 %v459, %v446
        %v734 = vrot.slane %v732, 3
        %vm735 = vcmask 1040384
        %v738 = vsel %vm735, %v732, %v734
        %740 = vst [vmem:[%s387] sm:$0x3] %v738
        %v741 = vpack.c.bf16 %v495, %v482
        %v743 = vrot.slane %v741, 3
        %v746 = vsel %vm735, %v741, %v743
        %748 = vst [vmem:[%s394] sm:$0x3] %v746
        %s749 = smul.u32 32, %s35
        %p750 = scmp.lt.s32.totalorder %s34, 1
        %s751 = scalar_select %p750, %s34, 1
        %p752 = scmp.lt.s32.totalorder %s749, 31
        %s753 = scalar_select %p752, %s749, 31
        %s754 = smul.addr %s751, 32
        %s755 = sadd.s32 %s753, %s754
        %s756 = smul.addr %s755, 4
        %s757 = scalar_lea.vmem %s7, %s756
        %s758 = sand.u32 %s234, 1
        %s759 = scalar_lea.sflag [#allocation4], %s758
        %s760 = sand.u32 %s234, 1
        %s761 = smul.addr %s760, 2
        %s762 = scalar_lea.vmem [#allocation5], %s761
        %s763 = sand.u32 %s262, 1
        %s764 = scalar_lea.sflag [#allocation7], %s763
        %s765 = sand.u32 %s262, 1
        %s766 = smul.addr %s765, 2
        %s767 = scalar_lea.vmem [#allocation6], %s766
        // Predicated region
        $region53: #{tpu_custom_call.1} parent=47 // pred_check
          %p768 = pneg %p216
        $region54: #{tpu_custom_call.1} parent=47 // pred_check_branch
          %770 = sbr.rel (%p768) target = $region56
        $region55: #{tpu_custom_call.1} parent=47 // pred_region
          %s771 = smul.u32 32, %s35
        $region56: #{tpu_custom_call.1} parent=47 // pred_fallthru
          _
        // Predicated region
        $region57: #{tpu_custom_call.1} parent=47 // pred_check
          %p772 = pneg %p244
        $region58: #{tpu_custom_call.1} parent=47 // pred_check_branch
          %774 = sbr.rel (%p772) target = $region60
        $region59: #{tpu_custom_call.1} parent=47 // pred_region
          %s775 = smul.u32 2, %s35
          %777 = vsyncadd %s759, 0
          %s778 = smul.addr %s34, 2
          %s779 = sadd.s32 %s775, %s778
          %s780 = scalar_lea.hbm %s8, %s779
          %s782 = sshll.u32 %s762, 4
          %s783 = int_to_ptr.vmem [resolvable:$true] %s782
          %s784 = sshll.u32 %s780, 4
          %s785 = int_to_ptr.hbm [resolvable:$true] %s784
          %787 = dma.vmem_to_hbm [thread:$0]  %s783, 32, %s785, %s759
        $region60: #{tpu_custom_call.1} parent=47 // pred_fallthru
          _
        // Predicated region
        $region61: #{tpu_custom_call.1} parent=47 // pred_check
          %p788 = pneg %p272
        $region62: #{tpu_custom_call.1} parent=47 // pred_check_branch
          %790 = sbr.rel (%p788) target = $region64
        $region63: #{tpu_custom_call.1} parent=47 // pred_region
          %s791 = smul.u32 2, %s35
          %793 = vsyncadd %s764, 0
          %s794 = smul.addr %s34, 2
          %s795 = sadd.s32 %s791, %s794
          %s796 = scalar_lea.hbm %s9, %s795
          %s798 = sshll.u32 %s767, 4
          %s799 = int_to_ptr.vmem [resolvable:$true] %s798
          %s800 = sshll.u32 %s796, 4
          %s801 = int_to_ptr.hbm [resolvable:$true] %s800
          %803 = dma.vmem_to_hbm [thread:$0]  %s799, 32, %s801, %s764
        $region64: #{tpu_custom_call.1} parent=47 // pred_fallthru
          _
      $region48: #{tpu_custom_call.1} parent=5 // pred_fallthru
        _
      %p804 = scmp.le.s32.totalorder 2, %s25
      // Predicated region
      $region65: #{tpu_custom_call.1} parent=5 // pred_check
        %p805 = pneg %p804
      $region66: #{tpu_custom_call.1} parent=5 // pred_check_branch
        %807 = sbr.rel (%p805) target = $region68
      $region67: #{tpu_custom_call.1} parent=5 // pred_region
        %s808 = ssub.s32 %s25, 2
        // Predicated region
        $region69: #{tpu_custom_call.1} parent=67 // pred_check
          %p809 = pneg %p222
        $region70: #{tpu_custom_call.1} parent=67 // pred_check_branch
          %811 = sbr.rel (%p809) target = $region72
        $region71: #{tpu_custom_call.1} parent=67 // pred_region
          %s812 = smul.u32 32, %s37
          %p813 = scmp.lt.s32.totalorder %s36, 1
          %s814 = scalar_select %p813, %s36, 1
          %p815 = scmp.lt.s32.totalorder %s812, 31
          %s816 = scalar_select %p815, %s812, 31
          %s817 = smul.addr %s814, 32
          %s818 = sadd.s32 %s816, %s817
          %s819 = smul.addr %s818, 4
          %s820 = scalar_lea.vmem %s7, %s819
        $region72: #{tpu_custom_call.1} parent=67 // pred_fallthru
          _
        // Predicated region
        $region73: #{tpu_custom_call.1} parent=67 // pred_check
          %p821 = pneg %p250
        $region74: #{tpu_custom_call.1} parent=67 // pred_check_branch
          %823 = sbr.rel (%p821) target = $region76
        $region75: #{tpu_custom_call.1} parent=67 // pred_region
          %s824 = sand.u32 %s235, 1
          %s825 = scalar_lea.sflag [#allocation4], %s824
          %s826 = sand.u32 %s235, 1
          %s827 = smul.addr %s826, 2
          %s828 = scalar_lea.vmem [#allocation5], %s827
          %830 = dma.done %s825, 32
        $region76: #{tpu_custom_call.1} parent=67 // pred_fallthru
          _
        // Predicated region
        $region77: #{tpu_custom_call.1} parent=67 // pred_check
          %p831 = pneg %p278
        $region78: #{tpu_custom_call.1} parent=67 // pred_check_branch
          %833 = sbr.rel (%p831) target = $region80
        $region79: #{tpu_custom_call.1} parent=67 // pred_region
          %s834 = sand.u32 %s263, 1
          %s835 = scalar_lea.sflag [#allocation7], %s834
          %s836 = sand.u32 %s263, 1
          %s837 = smul.addr %s836, 2
          %s838 = scalar_lea.vmem [#allocation6], %s837
          %840 = dma.done %s835, 32
        $region80: #{tpu_custom_call.1} parent=67 // pred_fallthru
          _
      $region68: #{tpu_custom_call.1} parent=5 // pred_fallthru
        _
    $region6: #{tpu_custom_call.1} parent=1 // loop_footer
      %s29 = sadd.s32 1, %s25
    $region7: #{tpu_custom_call.1} parent=1 // loop_footer_branch
      %24 = sbr.rel target = $region3
    $region8: #{tpu_custom_call.1} parent=1 // loop_exit
      _
    %841 = vsyncpa [#allocation3], 1
    %s842 = scalar_lea.sflag [#allocation3], 1
    %843 = vsyncpa %s842, 1
    %844 = vsyncpa [#allocation4], 1
    %s845 = scalar_lea.sflag [#allocation4], 1
    %846 = vsyncpa %s845, 1
    %847 = vsyncpa [#allocation7], 1
    %s848 = scalar_lea.sflag [#allocation7], 1
    %849 = vsyncpa %s848, 1

</llo_original>
